<compile_context>
chip_gen: v5e
topology: v5e:2x2
jax: 0.10.0
libtpu: 0.0.40
codegen_flags: <defaults>
</compile_context>

<pallas_src>
from functools import partial

import jax
import jax.numpy as jnp
from jax.experimental import pallas as pl
from jax.experimental.pallas import tpu as pltpu


def _res_block_kernel(x_ref, w1_ref, w2_ref, mask_ref, bias_ref, out_ref, *,
                      W, C, LW):
    """One packed block of B images per grid step.

    x_ref    : (C, LW)      LW = B*H*W; channels (padded to mult. of 8) on
                            sublanes, flat spatial of B images on lanes
    w*_ref   : (C, 9*C)     conv weights with BN scale folded in, columns
                            ordered (ky*3+kx)*C + in_c
    mask_ref : (9, LW)      0/1 per-tap validity mask (per-image borders)
    bias_ref : (2, C, 1)    folded BatchNorm biases for bn1 / bn2
    out_ref  : (C, LW)
    """
    x = x_ref[...].astype(jnp.float32)                        # (C, LW)

    def conv3x3(act, w_ref):
        # Value-based im2col: 9 lane-rolled (XLU) + border-masked (VPU) copies
        # concatenated along the sublane axis (each piece is a whole number of
        # (8,128) tiles since C % 8 == 0), then a single MXU matmul with
        # K = 9*C.  No VMEM scratch round trip.
        pieces = []
        for k in range(9):
            ky, kx = divmod(k, 3)
            off = (ky - 1) * W + (kx - 1)          # flat-index tap offset
            shifted = act if off == 0 else pltpu.roll(
                act, shift=(-off) % LW, axis=1)
            if ky == 1 and kx == 1:                # center tap: always valid
                pieces.append(shifted)
            else:
                pieces.append(shifted * mask_ref[k:k + 1, :])
        slab = jnp.concatenate(pieces, axis=0)     # (9*C, LW) value (vregs)
        return jnp.dot(w_ref[...], slab, preferred_element_type=jnp.float32)

    # conv1 (BN1 scale folded into w1) + BN1 bias + ReLU
    h1 = jnp.maximum(conv3x3(x, w1_ref) + bias_ref[0], 0.0)
    # conv2 (BN2 scale folded into w2) + BN2 bias
    h2 = conv3x3(h1, w2_ref) + bias_ref[1]
    # residual add + ReLU (shortcut already resident as `x`)
    out_ref[...] = jnp.maximum(h2 + x, 0.0).astype(out_ref.dtype)


def _border_masks(H, W):
    """(9, H*W) f32 validity masks for the 3x3 taps of a padding=1 conv."""
    yy, xx = jnp.meshgrid(jnp.arange(H), jnp.arange(W), indexing="ij")
    masks = []
    for k in range(9):
        ky, kx = divmod(k, 3)
        oy, ox = ky - 1, kx - 1
        m = ((yy + oy >= 0) & (yy + oy < H) & (xx + ox >= 0) & (xx + ox < W))
        masks.append(m.reshape(H * W))
    return jnp.stack(masks).astype(jnp.float32)


def _device_vmem_bytes():
    """Physical VMEM of the attached TPU; conservative fallback if unknown."""
    try:
        info = pltpu.get_tpu_info()
        v = getattr(info, "vmem_capacity_bytes", None)
        if v:
            return int(v)
    except Exception:
        pass
    return 64 * 1024 * 1024          # v7x per-TensorCore (smallest modern chip)


def _step_vmem_bytes(C, LW):
    """Rough per-grid-step VMEM footprint estimate (f32 bytes)."""
    img = 4 * C * LW
    return (2 * img + 2 * img                  # double-buffered x / out blocks
            + 2 * 2 * 4 * 9 * C * C            # w1, w2 (double-buffered)
            + 2 * 4 * 9 * LW                   # border masks
            + (9 + 3) * img                    # live slab + h1/h2/x values
            + 4096)


def res_block_pallas(x_nchw, w1, w2, bn1, bn2, eps=1e-5):
    """x_nchw: (N, C, H, W); w1, w2: (C, C, 3, 3) PyTorch OIHW layout.

    bn1/bn2: tuples (gamma, beta, running_mean, running_var), each shape (C,).
    Returns NCHW float32 output matching resBlock.forward (eval-mode BN).
    """
    N, C, H, W = x_nchw.shape
    HW = H * W
    if HW % 128 != 0:
        raise ValueError(f"H*W must be a multiple of 128 (got {HW}).")

    # Pad channels to a sublane tile (8) so slab pieces / MXU M are aligned.
    C_pad = max(8, -(-C // 8) * 8)

    dev_vmem = _device_vmem_bytes()
    budget = max(16 * 1024 * 1024, dev_vmem // 2)

    # Pack the largest divisor-of-N number of images per grid step that fits.
    B = 1
    for cand in range(1, N + 1):
        if N % cand == 0 and _step_vmem_bytes(C_pad, cand * HW) <= budget:
            B = cand
    NB = N // B
    LW = B * HW

    # Host-side layout: pad channels, then pack B images along the lane axis:
    # (N, C, H, W) -> (NB, C_pad, B*HW).
    x_p = jnp.pad(x_nchw.astype(jnp.float32),
                  ((0, 0), (0, C_pad - C), (0, 0), (0, 0)))
    x = (x_p.reshape(NB, B, C_pad, HW)
         .transpose(0, 2, 1, 3)
         .reshape(NB, C_pad, LW))

    def fold_bn(bn):
        gamma, beta, mean, var = bn
        s = gamma / jnp.sqrt(var + eps)
        b = beta - mean * s
        s = jnp.pad(s.astype(jnp.float32), (0, C_pad - C))
        b = jnp.pad(b.astype(jnp.float32), (0, C_pad - C))
        return s, b

    def prep_w(w, s):
        # OIHW -> (out_c, (ky*3+kx)*C_pad + in_c), BN scale folded into rows.
        w_p = jnp.pad(w.astype(jnp.float32),
                      ((0, C_pad - C), (0, C_pad - C), (0, 0), (0, 0)))
        wf = jnp.transpose(w_p, (0, 2, 3, 1)).reshape(C_pad, 9 * C_pad)
        return wf * s.reshape(C_pad, 1)

    s1, b1 = fold_bn(bn1)
    s2, b2 = fold_bn(bn2)
    w1f = prep_w(w1, s1)
    w2f = prep_w(w2, s2)
    bias = jnp.stack([b1.reshape(C_pad, 1), b2.reshape(C_pad, 1)])  # (2,C,1)
    masks = jnp.tile(_border_masks(H, W), (1, B))                   # (9, LW)

    vmem_limit = int(min(max(_step_vmem_bytes(C_pad, LW) * 3 // 2,
                             16 * 1024 * 1024), dev_vmem))

    kernel = partial(_res_block_kernel, W=W, C=C_pad, LW=LW)
    out = pl.pallas_call(
        kernel,
        out_shape=jax.ShapeDtypeStruct((NB, C_pad, LW), jnp.float32),
        grid_spec=pltpu.PrefetchScalarGridSpec(
            num_scalar_prefetch=0,
            grid=(NB,),
            in_specs=[
                pl.BlockSpec((None, C_pad, LW), lambda n: (n, 0, 0)),   # x
                pl.BlockSpec((C_pad, 9 * C_pad), lambda n: (0, 0)),     # w1*s1
                pl.BlockSpec((C_pad, 9 * C_pad), lambda n: (0, 0)),     # w2*s2
                pl.BlockSpec((9, LW), lambda n: (0, 0)),                # masks
                pl.BlockSpec((2, C_pad, 1), lambda n: (0, 0, 0)),       # biases
            ],
            out_specs=pl.BlockSpec((None, C_pad, LW), lambda n: (n, 0, 0)),
        ),
        compiler_params=pltpu.CompilerParams(
            # Packed batch blocks are fully independent -> shard across v7x's
            # two TensorCores; neutral on v5e/v6e.
            dimension_semantics=("parallel",),
            vmem_limit_bytes=vmem_limit),
    )(x, w1f, w2f, masks, bias)

    # Unpack lanes back to NCHW and drop the padded channels.
    out = (out.reshape(NB, C_pad, B, HW)
           .transpose(0, 2, 1, 3)
           .reshape(N, C_pad, H, W))
    return out[:, :C]


def res_block_ref(x, w1, w2, bn1, bn2, eps=1e-5):
    """Pure-JAX reference (NCHW, same semantics as the PyTorch module, eval)."""
    def conv(t, w):
        return jax.lax.conv_general_dilated(
            t, w, window_strides=(1, 1), padding=((1, 1), (1, 1)),
            dimension_numbers=("NCHW", "OIHW", "NCHW"))

    def bn(t, p):
        g, b, m, v = (a[None, :, None, None] for a in p)
        return (t - m) / jnp.sqrt(v + eps) * g + b

    out = jnp.maximum(bn(conv(x, w1), bn1), 0.0)
    out = bn(conv(out, w2), bn2)
    return jnp.maximum(out + x, 0.0)


if __name__ == "__main__":
    N, C, H, W = 2, 4, 16, 16
    key = jax.random.PRNGKey(0)
    kx, kw1, kw2, kg1, kb1, kg2, kb2 = jax.random.split(key, 7)

    x = jax.random.normal(kx, (N, C, H, W), jnp.float32)
    # Conv weights (deterministic synthetic init), OIHW like PyTorch.
    w1 = jax.random.normal(kw1, (C, C, 3, 3), jnp.float32) * 0.2
    w2 = jax.random.normal(kw2, (C, C, 3, 3), jnp.float32) * 0.2
    # BatchNorm params: learned gamma/beta random-ish, fresh running stats.
    bn1 = (jax.random.uniform(kg1, (C,), jnp.float32, 0.5, 1.5),
           jax.random.normal(kb1, (C,), jnp.float32) * 0.1,
           jnp.zeros((C,), jnp.float32),
           jnp.ones((C,), jnp.float32))
    bn2 = (jax.random.uniform(kg2, (C,), jnp.float32, 0.5, 1.5),
           jax.random.normal(kb2, (C,), jnp.float32) * 0.1,
           jnp.zeros((C,), jnp.float32),
           jnp.ones((C,), jnp.float32))

    out = jax.block_until_ready(res_block_pallas(x, w1, w2, bn1, bn2))
    ref = jax.block_until_ready(res_block_ref(x, w1, w2, bn1, bn2))

    assert out.shape == (N, C, H, W), out.shape
    assert jnp.allclose(out, ref, atol=1e-3, rtol=1e-3), \
        float(jnp.max(jnp.abs(out - ref)))
    print("KERNEL_OK")
</pallas_src>

<mosaic_0001>
module attributes {stable_mosaic.version = 11 : i64} {
  func.func @_res_block_kernel(%arg0: i32, %arg1: memref<1x8x512xf32, #tpu.memory_space<vmem>>, %arg2: memref<8x72xf32, #tpu.memory_space<vmem>>, %arg3: memref<8x72xf32, #tpu.memory_space<vmem>>, %arg4: memref<9x512xf32, #tpu.memory_space<vmem>>, %arg5: memref<2x8x1xf32, #tpu.memory_space<vmem>>, %arg6: memref<1x8x512xf32, #tpu.memory_space<vmem>>) attributes {dimension_semantics = [#tpu.dimension_semantics<parallel>], iteration_bounds = array<i64: 1>, scalar_prefetch = 0 : i64, scratch_operands = 0 : i64, tpu.core_type = #tpu.core_type<tc>, window_params = [{transform_indices = @transform_0, window_bounds = array<i64: 1, 8, 512>}, {pipeline_mode = #tpu.pipeline_mode<synchronous>, transform_indices = @transform_1, window_bounds = array<i64: 8, 72>}, {pipeline_mode = #tpu.pipeline_mode<synchronous>, transform_indices = @transform_2, window_bounds = array<i64: 8, 72>}, {pipeline_mode = #tpu.pipeline_mode<synchronous>, transform_indices = @transform_3, window_bounds = array<i64: 9, 512>}, {pipeline_mode = #tpu.pipeline_mode<synchronous>, transform_indices = @transform_4, window_bounds = array<i64: 2, 8, 1>}, {transform_indices = @transform_5, window_bounds = array<i64: 1, 8, 512>}]} {
    %c0 = arith.constant 0 : index
    %c0_0 = arith.constant 0 : index
    %c0_1 = arith.constant 0 : index
    %0 = vector.load %arg1[%c0, %c0_0, %c0_1] : memref<1x8x512xf32, #tpu.memory_space<vmem>>, vector<1x8x512xf32>
    %1 = vector.shape_cast %0 : vector<1x8x512xf32> to vector<8x512xf32>
    %c17_i32 = arith.constant 17 : i32
    %2 = tpu.dynamic_rotate %1 by %c17_i32 dim 1 : vector<8x512xf32>, i32 -> vector<8x512xf32>
    %c0_2 = arith.constant 0 : index
    %c0_3 = arith.constant 0 : index
    %3 = vector.load %arg4[%c0_2, %c0_3] : memref<9x512xf32, #tpu.memory_space<vmem>>, vector<1x512xf32>
    %4 = vector.broadcast %3 : vector<1x512xf32> to vector<8x512xf32>
    %5 = arith.mulf %2, %4 : vector<8x512xf32>
    %c16_i32 = arith.constant 16 : i32
    %6 = tpu.dynamic_rotate %1 by %c16_i32 dim 1 : vector<8x512xf32>, i32 -> vector<8x512xf32>
    %c1 = arith.constant 1 : index
    %c0_4 = arith.constant 0 : index
    %7 = vector.load %arg4[%c1, %c0_4] : memref<9x512xf32, #tpu.memory_space<vmem>>, vector<1x512xf32>
    %8 = vector.broadcast %7 : vector<1x512xf32> to vector<8x512xf32>
    %9 = arith.mulf %6, %8 : vector<8x512xf32>
    %c15_i32 = arith.constant 15 : i32
    %10 = tpu.dynamic_rotate %1 by %c15_i32 dim 1 : vector<8x512xf32>, i32 -> vector<8x512xf32>
    %c2 = arith.constant 2 : index
    %c0_5 = arith.constant 0 : index
    %11 = vector.load %arg4[%c2, %c0_5] : memref<9x512xf32, #tpu.memory_space<vmem>>, vector<1x512xf32>
    %12 = vector.broadcast %11 : vector<1x512xf32> to vector<8x512xf32>
    %13 = arith.mulf %10, %12 : vector<8x512xf32>
    %c1_i32 = arith.constant 1 : i32
    %14 = tpu.dynamic_rotate %1 by %c1_i32 dim 1 : vector<8x512xf32>, i32 -> vector<8x512xf32>
    %c3 = arith.constant 3 : index
    %c0_6 = arith.constant 0 : index
    %15 = vector.load %arg4[%c3, %c0_6] : memref<9x512xf32, #tpu.memory_space<vmem>>, vector<1x512xf32>
    %16 = vector.broadcast %15 : vector<1x512xf32> to vector<8x512xf32>
    %17 = arith.mulf %14, %16 : vector<8x512xf32>
    %c511_i32 = arith.constant 511 : i32
    %18 = tpu.dynamic_rotate %1 by %c511_i32 dim 1 : vector<8x512xf32>, i32 -> vector<8x512xf32>
    %c5 = arith.constant 5 : index
    %c0_7 = arith.constant 0 : index
    %19 = vector.load %arg4[%c5, %c0_7] : memref<9x512xf32, #tpu.memory_space<vmem>>, vector<1x512xf32>
    %20 = vector.broadcast %19 : vector<1x512xf32> to vector<8x512xf32>
    %21 = arith.mulf %18, %20 : vector<8x512xf32>
    %c497_i32 = arith.constant 497 : i32
    %22 = tpu.dynamic_rotate %1 by %c497_i32 dim 1 : vector<8x512xf32>, i32 -> vector<8x512xf32>
    %c6 = arith.constant 6 : index
    %c0_8 = arith.constant 0 : index
    %23 = vector.load %arg4[%c6, %c0_8] : memref<9x512xf32, #tpu.memory_space<vmem>>, vector<1x512xf32>
    %24 = vector.broadcast %23 : vector<1x512xf32> to vector<8x512xf32>
    %25 = arith.mulf %22, %24 : vector<8x512xf32>
    %c496_i32 = arith.constant 496 : i32
    %26 = tpu.dynamic_rotate %1 by %c496_i32 dim 1 : vector<8x512xf32>, i32 -> vector<8x512xf32>
    %c7 = arith.constant 7 : index
    %c0_9 = arith.constant 0 : index
    %27 = vector.load %arg4[%c7, %c0_9] : memref<9x512xf32, #tpu.memory_space<vmem>>, vector<1x512xf32>
    %28 = vector.broadcast %27 : vector<1x512xf32> to vector<8x512xf32>
    %29 = arith.mulf %26, %28 : vector<8x512xf32>
    %c495_i32 = arith.constant 495 : i32
    %30 = tpu.dynamic_rotate %1 by %c495_i32 dim 1 : vector<8x512xf32>, i32 -> vector<8x512xf32>
    %c8 = arith.constant 8 : index
    %c0_10 = arith.constant 0 : index
    %31 = vector.load %arg4[%c8, %c0_10] : memref<9x512xf32, #tpu.memory_space<vmem>>, vector<1x512xf32>
    %32 = vector.broadcast %31 : vector<1x512xf32> to vector<8x512xf32>
    %33 = arith.mulf %30, %32 : vector<8x512xf32>
    %34 = tpu.concatenate %5, %9, %13, %17, %1, %21, %25, %29, %33 in 0 : vector<8x512xf32>, vector<8x512xf32>, vector<8x512xf32>, vector<8x512xf32>, vector<8x512xf32>, vector<8x512xf32>, vector<8x512xf32>, vector<8x512xf32>, vector<8x512xf32> -> vector<72x512xf32>
    %c0_11 = arith.constant 0 : index
    %c0_12 = arith.constant 0 : index
    %35 = vector.load %arg2[%c0_11, %c0_12] : memref<8x72xf32, #tpu.memory_space<vmem>>, vector<8x72xf32>
    %cst = arith.constant dense<0.000000e+00> : vector<8x512xf32>
    %36 = tpu.matmul %35, %34, %cst {dimension_numbers = #tpu.dot_dimension_numbers<[1], [0], [0], [1], [0, 0, 1, 1], [], []>} : vector<8x72xf32>, vector<72x512xf32>, vector<8x512xf32> -> vector<8x512xf32>
    %c0_13 = arith.constant 0 : index
    %c0_14 = arith.constant 0 : index
    %c0_15 = arith.constant 0 : index
    %37 = vector.load %arg5[%c0_13, %c0_14, %c0_15] : memref<2x8x1xf32, #tpu.memory_space<vmem>>, vector<1x8x1xf32>
    %38 = vector.shape_cast %37 : vector<1x8x1xf32> to vector<8x1xf32>
    %39 = vector.broadcast %38 : vector<8x1xf32> to vector<8x512xf32>
    %40 = arith.addf %36, %39 : vector<8x512xf32>
    %cst_16 = arith.constant 0.000000e+00 : f32
    %41 = vector.broadcast %cst_16 : f32 to vector<8x512xf32>
    %42 = arith.maximumf %40, %41 : vector<8x512xf32>
    %c17_i32_17 = arith.constant 17 : i32
    %43 = tpu.dynamic_rotate %42 by %c17_i32_17 dim 1 : vector<8x512xf32>, i32 -> vector<8x512xf32>
    %c0_18 = arith.constant 0 : index
    %c0_19 = arith.constant 0 : index
    %44 = vector.load %arg4[%c0_18, %c0_19] : memref<9x512xf32, #tpu.memory_space<vmem>>, vector<1x512xf32>
    %45 = vector.broadcast %44 : vector<1x512xf32> to vector<8x512xf32>
    %46 = arith.mulf %43, %45 : vector<8x512xf32>
    %c16_i32_20 = arith.constant 16 : i32
    %47 = tpu.dynamic_rotate %42 by %c16_i32_20 dim 1 : vector<8x512xf32>, i32 -> vector<8x512xf32>
    %c1_21 = arith.constant 1 : index
    %c0_22 = arith.constant 0 : index
    %48 = vector.load %arg4[%c1_21, %c0_22] : memref<9x512xf32, #tpu.memory_space<vmem>>, vector<1x512xf32>
    %49 = vector.broadcast %48 : vector<1x512xf32> to vector<8x512xf32>
    %50 = arith.mulf %47, %49 : vector<8x512xf32>
    %c15_i32_23 = arith.constant 15 : i32
    %51 = tpu.dynamic_rotate %42 by %c15_i32_23 dim 1 : vector<8x512xf32>, i32 -> vector<8x512xf32>
    %c2_24 = arith.constant 2 : index
    %c0_25 = arith.constant 0 : index
    %52 = vector.load %arg4[%c2_24, %c0_25] : memref<9x512xf32, #tpu.memory_space<vmem>>, vector<1x512xf32>
    %53 = vector.broadcast %52 : vector<1x512xf32> to vector<8x512xf32>
    %54 = arith.mulf %51, %53 : vector<8x512xf32>
    %c1_i32_26 = arith.constant 1 : i32
    %55 = tpu.dynamic_rotate %42 by %c1_i32_26 dim 1 : vector<8x512xf32>, i32 -> vector<8x512xf32>
    %c3_27 = arith.constant 3 : index
    %c0_28 = arith.constant 0 : index
    %56 = vector.load %arg4[%c3_27, %c0_28] : memref<9x512xf32, #tpu.memory_space<vmem>>, vector<1x512xf32>
    %57 = vector.broadcast %56 : vector<1x512xf32> to vector<8x512xf32>
    %58 = arith.mulf %55, %57 : vector<8x512xf32>
    %c511_i32_29 = arith.constant 511 : i32
    %59 = tpu.dynamic_rotate %42 by %c511_i32_29 dim 1 : vector<8x512xf32>, i32 -> vector<8x512xf32>
    %c5_30 = arith.constant 5 : index
    %c0_31 = arith.constant 0 : index
    %60 = vector.load %arg4[%c5_30, %c0_31] : memref<9x512xf32, #tpu.memory_space<vmem>>, vector<1x512xf32>
    %61 = vector.broadcast %60 : vector<1x512xf32> to vector<8x512xf32>
    %62 = arith.mulf %59, %61 : vector<8x512xf32>
    %c497_i32_32 = arith.constant 497 : i32
    %63 = tpu.dynamic_rotate %42 by %c497_i32_32 dim 1 : vector<8x512xf32>, i32 -> vector<8x512xf32>
    %c6_33 = arith.constant 6 : index
    %c0_34 = arith.constant 0 : index
    %64 = vector.load %arg4[%c6_33, %c0_34] : memref<9x512xf32, #tpu.memory_space<vmem>>, vector<1x512xf32>
    %65 = vector.broadcast %64 : vector<1x512xf32> to vector<8x512xf32>
    %66 = arith.mulf %63, %65 : vector<8x512xf32>
    %c496_i32_35 = arith.constant 496 : i32
    %67 = tpu.dynamic_rotate %42 by %c496_i32_35 dim 1 : vector<8x512xf32>, i32 -> vector<8x512xf32>
    %c7_36 = arith.constant 7 : index
    %c0_37 = arith.constant 0 : index
    %68 = vector.load %arg4[%c7_36, %c0_37] : memref<9x512xf32, #tpu.memory_space<vmem>>, vector<1x512xf32>
    %69 = vector.broadcast %68 : vector<1x512xf32> to vector<8x512xf32>
    %70 = arith.mulf %67, %69 : vector<8x512xf32>
    %c495_i32_38 = arith.constant 495 : i32
    %71 = tpu.dynamic_rotate %42 by %c495_i32_38 dim 1 : vector<8x512xf32>, i32 -> vector<8x512xf32>
    %c8_39 = arith.constant 8 : index
    %c0_40 = arith.constant 0 : index
    %72 = vector.load %arg4[%c8_39, %c0_40] : memref<9x512xf32, #tpu.memory_space<vmem>>, vector<1x512xf32>
    %73 = vector.broadcast %72 : vector<1x512xf32> to vector<8x512xf32>
    %74 = arith.mulf %71, %73 : vector<8x512xf32>
    %75 = tpu.concatenate %46, %50, %54, %58, %42, %62, %66, %70, %74 in 0 : vector<8x512xf32>, vector<8x512xf32>, vector<8x512xf32>, vector<8x512xf32>, vector<8x512xf32>, vector<8x512xf32>, vector<8x512xf32>, vector<8x512xf32>, vector<8x512xf32> -> vector<72x512xf32>
    %c0_41 = arith.constant 0 : index
    %c0_42 = arith.constant 0 : index
    %76 = vector.load %arg3[%c0_41, %c0_42] : memref<8x72xf32, #tpu.memory_space<vmem>>, vector<8x72xf32>
    %cst_43 = arith.constant dense<0.000000e+00> : vector<8x512xf32>
    %77 = tpu.matmul %76, %75, %cst_43 {dimension_numbers = #tpu.dot_dimension_numbers<[1], [0], [0], [1], [0, 0, 1, 1], [], []>} : vector<8x72xf32>, vector<72x512xf32>, vector<8x512xf32> -> vector<8x512xf32>
    %c1_44 = arith.constant 1 : index
    %c0_45 = arith.constant 0 : index
    %c0_46 = arith.constant 0 : index
    %78 = vector.load %arg5[%c1_44, %c0_45, %c0_46] : memref<2x8x1xf32, #tpu.memory_space<vmem>>, vector<1x8x1xf32>
    %79 = vector.shape_cast %78 : vector<1x8x1xf32> to vector<8x1xf32>
    %80 = vector.broadcast %79 : vector<8x1xf32> to vector<8x512xf32>
    %81 = arith.addf %77, %80 : vector<8x512xf32>
    %82 = arith.addf %81, %1 : vector<8x512xf32>
    %cst_47 = arith.constant 0.000000e+00 : f32
    %83 = vector.broadcast %cst_47 : f32 to vector<8x512xf32>
    %84 = arith.maximumf %82, %83 : vector<8x512xf32>
    %c0_48 = arith.constant 0 : index
    %c0_49 = arith.constant 0 : index
    %c0_50 = arith.constant 0 : index
    %85 = vector.load %arg6[%c0_48, %c0_49, %c0_50] : memref<1x8x512xf32, #tpu.memory_space<vmem>>, vector<1x8x512xf32>
    %86 = vector.shape_cast %85 : vector<1x8x512xf32> to vector<8x512xf32>
    %87 = vector.shape_cast %84 : vector<8x512xf32> to vector<1x8x512xf32>
    tpu.vector_store %arg6[%c0_48, %c0_49, %c0_50], %87 {strides = array<i32>} : memref<1x8x512xf32, #tpu.memory_space<vmem>>, vector<1x8x512xf32>,
    return
  }
  func.func @transform_0(%arg0: i32) -> (i32, i32, i32) {
    %c0_i32 = arith.constant 0 : i32
    %c0_i32_0 = arith.constant 0 : i32
    %c0_i32_1 = arith.constant 0 : i32
    return %arg0, %c0_i32, %c0_i32_0 : i32, i32, i32
  }
  func.func @transform_1(%arg0: i32) -> (i32, i32) {
    %c0_i32 = arith.constant 0 : i32
    %c0_i32_0 = arith.constant 0 : i32
    %c0_i32_1 = arith.constant 0 : i32
    return %c0_i32, %c0_i32_0 : i32, i32
  }
  func.func @transform_2(%arg0: i32) -> (i32, i32) {
    %c0_i32 = arith.constant 0 : i32
    %c0_i32_0 = arith.constant 0 : i32
    %c0_i32_1 = arith.constant 0 : i32
    return %c0_i32, %c0_i32_0 : i32, i32
  }
  func.func @transform_3(%arg0: i32) -> (i32, i32) {
    %c0_i32 = arith.constant 0 : i32
    %c0_i32_0 = arith.constant 0 : i32
    %c0_i32_1 = arith.constant 0 : i32
    return %c0_i32, %c0_i32_0 : i32, i32
  }
  func.func @transform_4(%arg0: i32) -> (i32, i32, i32) {
    %c0_i32 = arith.constant 0 : i32
    %c0_i32_0 = arith.constant 0 : i32
    %c0_i32_1 = arith.constant 0 : i32
    %c0_i32_2 = arith.constant 0 : i32
    return %c0_i32, %c0_i32_0, %c0_i32_1 : i32, i32, i32
  }
  func.func @transform_5(%arg0: i32) -> (i32, i32, i32) {
    %c0_i32 = arith.constant 0 : i32
    %c0_i32_0 = arith.constant 0 : i32
    %c0_i32_1 = arith.constant 0 : i32
    return %arg0, %c0_i32, %c0_i32_0 : i32, i32, i32
  }
}

</mosaic_0001>

<llo_original>
// kernel: tpu_custom_call.1
$region0: #{tpu_custom_call.1}
  #allocation0 [shape = 'u32[]', space=smem, size = 0x4, offset = 0x4, fixed_abs, tag = 'smem constant byte address 0x4 - core index']
  #allocation1 [shape = 'u32[72,128]{1,0:T(1,128)}', space=vmem, size = 0x9000, scoped, tag = 'internal scratch']
  %s0 = inlined_call_operand.hbm [shape: f32[1,8,512], index: 0, kind: input, shape index: {}]
  %s1 = inlined_call_operand.vmem [shape: f32[8,72], index: 1, kind: input, shape index: {}]
  %s2 = inlined_call_operand.vmem [shape: f32[8,72], index: 2, kind: input, shape index: {}]
  %s3 = inlined_call_operand.hbm [shape: f32[9,512], index: 3, kind: input, shape index: {}]
  %s4 = inlined_call_operand.vmem [shape: f32[2,8,1], index: 4, kind: input, shape index: {}]
  %s5 = inlined_call_operand.hbm [shape: f32[1,8,512], index: 5, kind: output, shape index: {}]
  %s6 = sld [smem:[#allocation0]]
  $region38: #{tpu_custom_call.1} parent=0
    _
  %s8 = ssub.s32 1, %s6
  %s9 = scalar_select 0, %s8, %s6
  $region1: #{tpu_custom_call.1} parent=0
    #allocation2 [shape = 'u8[16384]{0}', space=vmem, size = 0x4000, scoped, tag = 'input window, operand 0, single buffered']
    #allocation3 [shape = 's32[1]{0}', space=sflag, size = 0x4, scoped, tag = 'scoped memory for tpu_custom_call.1']
    #allocation4 [shape = 's32[1]{0}', space=sflag, size = 0x4, scoped, tag = 'scoped memory for tpu_custom_call.1']
    #allocation5 [shape = 'u8[32768]{0}', space=vmem, size = 0x8000, scoped, tag = 'input window, operand 3, single buffered']
    #allocation6 [shape = 's32[1]{0}', space=sflag, size = 0x4, scoped, tag = 'scoped memory for tpu_custom_call.1']
    #allocation7 [shape = 'u8[16384]{0}', space=vmem, size = 0x4000, scoped, tag = 'output window, operand 0, single buffered']
    %10 = vsyncpa [#allocation3], 0
    %11 = vsyncpa [#allocation6], 0
    %12 = vsyncpa [#allocation4], 0
    // Predicated region
    $region2: #{tpu_custom_call.1} parent=1 // pred_check
      _
    $region3: #{tpu_custom_call.1} parent=1 // pred_check_branch
      %14 = sbr.rel (0) target = $region5
    $region4: #{tpu_custom_call.1} parent=1 // pred_region
      %16 = vsyncadd [#allocation3], 0
      %s18 = sshll.u32 %s0, 4
      %s19 = int_to_ptr.hbm [resolvable:$true] %s18
      %s20 = sshll.u32 [#allocation2], 4
      %s21 = int_to_ptr.vmem [resolvable:$true] %s20
      %23 = dma.hbm_to_vmem [thread:$0]  %s19, 512, %s21, [#allocation3]
    $region5: #{tpu_custom_call.1} parent=1 // pred_fallthru
      _
    // Predicated region
    $region6: #{tpu_custom_call.1} parent=1 // pred_check
      _
    $region7: #{tpu_custom_call.1} parent=1 // pred_check_branch
      %25 = sbr.rel (0) target = $region9
    $region8: #{tpu_custom_call.1} parent=1 // pred_region
      _
    $region9: #{tpu_custom_call.1} parent=1 // pred_fallthru
      _
    // Predicated region
    $region10: #{tpu_custom_call.1} parent=1 // pred_check
      _
    $region11: #{tpu_custom_call.1} parent=1 // pred_check_branch
      %27 = sbr.rel (0) target = $region13
    $region12: #{tpu_custom_call.1} parent=1 // pred_region
      _
    $region13: #{tpu_custom_call.1} parent=1 // pred_fallthru
      _
    // Predicated region
    $region14: #{tpu_custom_call.1} parent=1 // pred_check
      _
    $region15: #{tpu_custom_call.1} parent=1 // pred_check_branch
      %29 = sbr.rel (0) target = $region17
    $region16: #{tpu_custom_call.1} parent=1 // pred_region
      %31 = vsyncadd [#allocation6], 0
      %s32 = sshll.u32 %s3, 4
      %s33 = int_to_ptr.hbm [resolvable:$true] %s32
      %s34 = sshll.u32 [#allocation5], 4
      %s35 = int_to_ptr.vmem [resolvable:$true] %s34
      %40 = dma.hbm_to_vmem [thread:$0]  %s33, 1024, %s35, [#allocation6], 512, 512, 32
    $region17: #{tpu_custom_call.1} parent=1 // pred_fallthru
      _
    // Predicated region
    $region18: #{tpu_custom_call.1} parent=1 // pred_check
      _
    $region19: #{tpu_custom_call.1} parent=1 // pred_check_branch
      %42 = sbr.rel (0) target = $region21
    $region20: #{tpu_custom_call.1} parent=1 // pred_region
      _
    $region21: #{tpu_custom_call.1} parent=1 // pred_fallthru
      _
    // Predicated region
    $region22: #{tpu_custom_call.1} parent=1 // pred_check
      _
    $region23: #{tpu_custom_call.1} parent=1 // pred_check_branch
      %44 = sbr.rel (0) target = $region25
    $region24: #{tpu_custom_call.1} parent=1 // pred_region
      %46 = dma.done [#allocation3], 512
    $region25: #{tpu_custom_call.1} parent=1 // pred_fallthru
      _
    // Predicated region
    $region26: #{tpu_custom_call.1} parent=1 // pred_check
      _
    $region27: #{tpu_custom_call.1} parent=1 // pred_check_branch
      %48 = sbr.rel (0) target = $region29
    $region28: #{tpu_custom_call.1} parent=1 // pred_region
      %50 = dma.done [#allocation6], 1024
    $region29: #{tpu_custom_call.1} parent=1 // pred_fallthru
      _
    %v51 = vld [vmem:[#allocation2] sm:$0xff]
    %v52 = vld [vmem:[#allocation2 + $0x8] sm:$0xff]
    %v53 = vld [vmem:[#allocation2 + $0x10] sm:$0xff]
    %v54 = vld [vmem:[#allocation2 + $0x18] sm:$0xff]
    %55 = vrot.lane.b32.xlu0 %v51, 17
    %v56 = vpop.permute.xlu0 %55
    %57 = vrot.lane.b32.xlu0 %v52, 17
    %v58 = vpop.permute.xlu0 %57
    %59 = vrot.lane.b32.xlu0 %v53, 17
    %v60 = vpop.permute.xlu0 %59
    %61 = vrot.lane.b32.xlu0 %v54, 17
    %v62 = vpop.permute.xlu0 %61
    %v63 = vlaneseq
    %v64 = vand.u32 %v63, 127
    %vm65 = vcmp.lt.s32.totalorder %v64, 17
    %v66 = vsel %vm65, %v60, %v62
    %v67 = vsel %vm65, %v58, %v60
    %v68 = vsel %vm65, %v56, %v58
    %v69 = vsel %vm65, %v62, %v56
    %v70 = vld [vmem:[#allocation5] ss:$8 sm:$0xf]
    %v72 = vperm.slane %v70, 0
    %v73 = vperm.slane %v70, 1
    %v74 = vperm.slane %v70, 2
    %v75 = vperm.slane %v70, 3
    %v80 = vmul.f32 %v69, %v72
    %v81 = vmul.f32 %v68, %v73
    %v82 = vmul.f32 %v67, %v74
    %v83 = vmul.f32 %v66, %v75
    %84 = vrot.lane.b32.xlu0 %v51, 16
    %v85 = vpop.permute.xlu0 %84
    %86 = vrot.lane.b32.xlu0 %v52, 16
    %v87 = vpop.permute.xlu0 %86
    %88 = vrot.lane.b32.xlu0 %v53, 16
    %v89 = vpop.permute.xlu0 %88
    %90 = vrot.lane.b32.xlu0 %v54, 16
    %v91 = vpop.permute.xlu0 %90
    %vm92 = vcmp.lt.s32.totalorder %v64, 16
    %v93 = vsel %vm92, %v89, %v91
    %v94 = vsel %vm92, %v87, %v89
    %v95 = vsel %vm92, %v85, %v87
    %v96 = vsel %vm92, %v91, %v85
    %s97 = scalar_lea.vmem [#allocation5], 1
    %v98 = vld [vmem:[%s97] ss:$8 sm:$0xf]
    %v100 = vperm.slane %v98, 0
    %v101 = vperm.slane %v98, 1
    %v102 = vperm.slane %v98, 2
    %v103 = vperm.slane %v98, 3
    %v108 = vmul.f32 %v96, %v100
    %v109 = vmul.f32 %v95, %v101
    %v110 = vmul.f32 %v94, %v102
    %v111 = vmul.f32 %v93, %v103
    %112 = vrot.lane.b32.xlu0 %v51, 15
    %v113 = vpop.permute.xlu0 %112
    %114 = vrot.lane.b32.xlu0 %v52, 15
    %v115 = vpop.permute.xlu0 %114
    %116 = vrot.lane.b32.xlu0 %v53, 15
    %v117 = vpop.permute.xlu0 %116
    %118 = vrot.lane.b32.xlu0 %v54, 15
    %v119 = vpop.permute.xlu0 %118
    %vm120 = vcmp.lt.s32.totalorder %v64, 15
    %v121 = vsel %vm120, %v117, %v119
    %v122 = vsel %vm120, %v115, %v117
    %v123 = vsel %vm120, %v113, %v115
    %v124 = vsel %vm120, %v119, %v113
    %s125 = scalar_lea.vmem [#allocation5], 2
    %v126 = vld [vmem:[%s125] ss:$8 sm:$0xf]
    %v128 = vperm.slane %v126, 0
    %v129 = vperm.slane %v126, 1
    %v130 = vperm.slane %v126, 2
    %v131 = vperm.slane %v126, 3
    %v136 = vmul.f32 %v124, %v128
    %v137 = vmul.f32 %v123, %v129
    %v138 = vmul.f32 %v122, %v130
    %v139 = vmul.f32 %v121, %v131
    %140 = vrot.lane.b32.xlu0 %v51, 1
    %v141 = vpop.permute.xlu0 %140
    %142 = vrot.lane.b32.xlu0 %v52, 1
    %v143 = vpop.permute.xlu0 %142
    %144 = vrot.lane.b32.xlu0 %v53, 1
    %v145 = vpop.permute.xlu0 %144
    %146 = vrot.lane.b32.xlu0 %v54, 1
    %v147 = vpop.permute.xlu0 %146
    %vm148 = vcmp.lt.s32.totalorder %v64, 1
    %v149 = vsel %vm148, %v145, %v147
    %v150 = vsel %vm148, %v143, %v145
    %v151 = vsel %vm148, %v141, %v143
    %v152 = vsel %vm148, %v147, %v141
    %s153 = scalar_lea.vmem [#allocation5], 3
    %v154 = vld [vmem:[%s153] ss:$8 sm:$0xf]
    %v156 = vperm.slane %v154, 0
    %v157 = vperm.slane %v154, 1
    %v158 = vperm.slane %v154, 2
    %v159 = vperm.slane %v154, 3
    %v164 = vmul.f32 %v152, %v156
    %v165 = vmul.f32 %v151, %v157
    %v166 = vmul.f32 %v150, %v158
    %v167 = vmul.f32 %v149, %v159
    %168 = vrot.lane.b32.xlu0 %v51, 127
    %v169 = vpop.permute.xlu0 %168
    %170 = vrot.lane.b32.xlu0 %v52, 127
    %v171 = vpop.permute.xlu0 %170
    %172 = vrot.lane.b32.xlu0 %v53, 127
    %v173 = vpop.permute.xlu0 %172
    %174 = vrot.lane.b32.xlu0 %v54, 127
    %v175 = vpop.permute.xlu0 %174
    %vm176 = vcmp.lt.s32.totalorder %v64, 127
    %v177 = vsel %vm176, %v173, %v175
    %v178 = vsel %vm176, %v171, %v173
    %v179 = vsel %vm176, %v169, %v171
    %v180 = vsel %vm176, %v175, %v169
    %s181 = scalar_lea.vmem [#allocation5], 5
    %v182 = vld [vmem:[%s181] ss:$8 sm:$0xf]
    %v184 = vperm.slane %v182, 0
    %v185 = vperm.slane %v182, 1
    %v186 = vperm.slane %v182, 2
    %v187 = vperm.slane %v182, 3
    %v192 = vmul.f32 %v179, %v184
    %v193 = vmul.f32 %v178, %v185
    %v194 = vmul.f32 %v177, %v186
    %v195 = vmul.f32 %v180, %v187
    %196 = vrot.lane.b32.xlu0 %v51, 113
    %v197 = vpop.permute.xlu0 %196
    %198 = vrot.lane.b32.xlu0 %v52, 113
    %v199 = vpop.permute.xlu0 %198
    %200 = vrot.lane.b32.xlu0 %v53, 113
    %v201 = vpop.permute.xlu0 %200
    %202 = vrot.lane.b32.xlu0 %v54, 113
    %v203 = vpop.permute.xlu0 %202
    %vm204 = vcmp.lt.s32.totalorder %v64, 113
    %v205 = vsel %vm204, %v201, %v203
    %v206 = vsel %vm204, %v199, %v201
    %v207 = vsel %vm204, %v197, %v199
    %v208 = vsel %vm204, %v203, %v197
    %s209 = scalar_lea.vmem [#allocation5], 6
    %v210 = vld [vmem:[%s209] ss:$8 sm:$0xf]
    %v212 = vperm.slane %v210, 0
    %v213 = vperm.slane %v210, 1
    %v214 = vperm.slane %v210, 2
    %v215 = vperm.slane %v210, 3
    %v220 = vmul.f32 %v207, %v212
    %v221 = vmul.f32 %v206, %v213
    %v222 = vmul.f32 %v205, %v214
    %v223 = vmul.f32 %v208, %v215
    %224 = vrot.lane.b32.xlu0 %v51, 112
    %v225 = vpop.permute.xlu0 %224
    %226 = vrot.lane.b32.xlu0 %v52, 112
    %v227 = vpop.permute.xlu0 %226
    %228 = vrot.lane.b32.xlu0 %v53, 112
    %v229 = vpop.permute.xlu0 %228
    %230 = vrot.lane.b32.xlu0 %v54, 112
    %v231 = vpop.permute.xlu0 %230
    %vm232 = vcmp.lt.s32.totalorder %v64, 112
    %v233 = vsel %vm232, %v229, %v231
    %v234 = vsel %vm232, %v227, %v229
    %v235 = vsel %vm232, %v225, %v227
    %v236 = vsel %vm232, %v231, %v225
    %s237 = scalar_lea.vmem [#allocation5], 7
    %v238 = vld [vmem:[%s237] ss:$8 sm:$0xf]
    %v240 = vperm.slane %v238, 0
    %v241 = vperm.slane %v238, 1
    %v242 = vperm.slane %v238, 2
    %v243 = vperm.slane %v238, 3
    %v248 = vmul.f32 %v235, %v240
    %v249 = vmul.f32 %v234, %v241
    %v250 = vmul.f32 %v233, %v242
    %v251 = vmul.f32 %v236, %v243
    %252 = vrot.lane.b32.xlu0 %v51, 111
    %v253 = vpop.permute.xlu0 %252
    %254 = vrot.lane.b32.xlu0 %v52, 111
    %v255 = vpop.permute.xlu0 %254
    %256 = vrot.lane.b32.xlu0 %v53, 111
    %v257 = vpop.permute.xlu0 %256
    %258 = vrot.lane.b32.xlu0 %v54, 111
    %v259 = vpop.permute.xlu0 %258
    %vm260 = vcmp.lt.s32.totalorder %v64, 111
    %v261 = vsel %vm260, %v257, %v259
    %v262 = vsel %vm260, %v255, %v257
    %v263 = vsel %vm260, %v253, %v255
    %v264 = vsel %vm260, %v259, %v253
    %s265 = scalar_lea.vmem [#allocation5], 32
    %v266 = vld [vmem:[%s265] ss:$8 sm:$0xf]
    %v268 = vperm.slane %v266, 0
    %v269 = vperm.slane %v266, 1
    %v270 = vperm.slane %v266, 2
    %v271 = vperm.slane %v266, 3
    %v276 = vmul.f32 %v263, %v268
    %v277 = vmul.f32 %v262, %v269
    %v278 = vmul.f32 %v261, %v270
    %v279 = vmul.f32 %v264, %v271
    %v280 = vld [vmem:[%s1] sm:$0xff]
    %v281 = vld [vmem:[%s4] sm:$0xff]
    %283 = vset.pattern.permute.xlu0 0
    %284 = vperm.xlu0 %283, %v281
    %v285 = vpop.permute.xlu0 %284
    %vm287 = vcmask 588800
    %v289 = vsel %vm287, %v280, 0
    %291 = vmatpush.msra.mxu0 0.0
    %292 = vmatpush.msra.mxu0 0.0
    %293 = vmatpush.msra.mxu0 0.0
    %294 = vmatpush.msra.mxu0 0.0
    %295 = vmatpush.msra.mxu0 0.0
    %296 = vmatpush.msra.mxu0 0.0
    %297 = vmatpush.msra.mxu0 0.0
    %298 = vmatpush.msra.mxu0 %v276
    %299 = vmatpush.msra.mxu0 %v248
    %300 = vmatpush.msra.mxu0 %v220
    %301 = vmatpush.msra.mxu0 %v192
    %302 = vmatpush.msra.mxu0 %v51
    %303 = vmatpush.msra.mxu0 %v164
    %304 = vmatpush.msra.mxu0 %v136
    %305 = vmatpush.msra.mxu0 %v108
    %306 = vmatpush.msra.mxu0 %v80
    %307 = vmatmul.f32.gmra.mxu0 %v289
    %v308 = vpop.f32.mrf.mxu0
    %v309 = vadd.f32 %v285, %v308
    %310 = vdwg.mxu0
    %311 = vmatpush.msra.mxu0 0.0
    %312 = vmatpush.msra.mxu0 0.0
    %313 = vmatpush.msra.mxu0 0.0
    %314 = vmatpush.msra.mxu0 0.0
    %315 = vmatpush.msra.mxu0 0.0
    %316 = vmatpush.msra.mxu0 0.0
    %317 = vmatpush.msra.mxu0 0.0
    %318 = vmatpush.msra.mxu0 %v277
    %319 = vmatpush.msra.mxu0 %v249
    %320 = vmatpush.msra.mxu0 %v221
    %321 = vmatpush.msra.mxu0 %v193
    %322 = vmatpush.msra.mxu0 %v52
    %323 = vmatpush.msra.mxu0 %v165
    %324 = vmatpush.msra.mxu0 %v137
    %325 = vmatpush.msra.mxu0 %v109
    %326 = vmatpush.msra.mxu0 %v81
    %327 = vmatmul.f32.gmra.mxu0 %v289
    %v328 = vpop.f32.mrf.mxu0
    %v329 = vadd.f32 %v285, %v328
    %330 = vdwg.mxu0
    %331 = vmatpush.msra.mxu0 0.0
    %332 = vmatpush.msra.mxu0 0.0
    %333 = vmatpush.msra.mxu0 0.0
    %334 = vmatpush.msra.mxu0 0.0
    %335 = vmatpush.msra.mxu0 0.0
    %336 = vmatpush.msra.mxu0 0.0
    %337 = vmatpush.msra.mxu0 0.0
    %338 = vmatpush.msra.mxu0 %v278
    %339 = vmatpush.msra.mxu0 %v250
    %340 = vmatpush.msra.mxu0 %v222
    %341 = vmatpush.msra.mxu0 %v194
    %342 = vmatpush.msra.mxu0 %v53
    %343 = vmatpush.msra.mxu0 %v166
    %344 = vmatpush.msra.mxu0 %v138
    %345 = vmatpush.msra.mxu0 %v110
    %346 = vmatpush.msra.mxu0 %v82
    %347 = vmatmul.f32.gmra.mxu0 %v289
    %v348 = vpop.f32.mrf.mxu0
    %v349 = vadd.f32 %v285, %v348
    %350 = vdwg.mxu0
    %351 = vmatpush.msra.mxu0 0.0
    %352 = vmatpush.msra.mxu0 0.0
    %353 = vmatpush.msra.mxu0 0.0
    %354 = vmatpush.msra.mxu0 0.0
    %355 = vmatpush.msra.mxu0 0.0
    %356 = vmatpush.msra.mxu0 0.0
    %357 = vmatpush.msra.mxu0 0.0
    %358 = vmatpush.msra.mxu0 %v279
    %359 = vmatpush.msra.mxu0 %v251
    %360 = vmatpush.msra.mxu0 %v223
    %361 = vmatpush.msra.mxu0 %v195
    %362 = vmatpush.msra.mxu0 %v54
    %363 = vmatpush.msra.mxu0 %v167
    %364 = vmatpush.msra.mxu0 %v139
    %365 = vmatpush.msra.mxu0 %v111
    %366 = vmatpush.msra.mxu0 %v83
    %367 = vmatmul.f32.gmra.mxu0 %v289
    %v368 = vpop.f32.mrf.mxu0
    %v369 = vadd.f32 %v285, %v368
    %370 = vdwg.mxu0
    %v371 = vmax.f32 %v309, 0.0
    %v372 = vmax.f32 %v329, 0.0
    %v373 = vmax.f32 %v349, 0.0
    %v374 = vmax.f32 %v369, 0.0
    %375 = vrot.lane.b32.xlu0 %v371, 17
    %v376 = vpop.permute.xlu0 %375
    %377 = vrot.lane.b32.xlu0 %v372, 17
    %v378 = vpop.permute.xlu0 %377
    %379 = vrot.lane.b32.xlu0 %v373, 17
    %v380 = vpop.permute.xlu0 %379
    %381 = vrot.lane.b32.xlu0 %v374, 17
    %v382 = vpop.permute.xlu0 %381
    %v383 = vsel %vm65, %v380, %v382
    %v384 = vsel %vm65, %v378, %v380
    %v385 = vsel %vm65, %v376, %v378
    %v386 = vsel %vm65, %v382, %v376
    %v387 = vmul.f32 %v386, %v72
    %v388 = vmul.f32 %v385, %v73
    %v389 = vmul.f32 %v384, %v74
    %v390 = vmul.f32 %v383, %v75
    %391 = vrot.lane.b32.xlu0 %v371, 16
    %v392 = vpop.permute.xlu0 %391
    %393 = vrot.lane.b32.xlu0 %v372, 16
    %v394 = vpop.permute.xlu0 %393
    %395 = vrot.lane.b32.xlu0 %v373, 16
    %v396 = vpop.permute.xlu0 %395
    %397 = vrot.lane.b32.xlu0 %v374, 16
    %v398 = vpop.permute.xlu0 %397
    %v399 = vsel %vm92, %v396, %v398
    %v400 = vsel %vm92, %v394, %v396
    %v401 = vsel %vm92, %v392, %v394
    %v402 = vsel %vm92, %v398, %v392
    %v403 = vmul.f32 %v402, %v100
    %v404 = vmul.f32 %v401, %v101
    %v405 = vmul.f32 %v400, %v102
    %v406 = vmul.f32 %v399, %v103
    %407 = vrot.lane.b32.xlu0 %v371, 15
    %v408 = vpop.permute.xlu0 %407
    %409 = vrot.lane.b32.xlu0 %v372, 15
    %v410 = vpop.permute.xlu0 %409
    %411 = vrot.lane.b32.xlu0 %v373, 15
    %v412 = vpop.permute.xlu0 %411
    %413 = vrot.lane.b32.xlu0 %v374, 15
    %v414 = vpop.permute.xlu0 %413
    %v415 = vsel %vm120, %v412, %v414
    %v416 = vsel %vm120, %v410, %v412
    %v417 = vsel %vm120, %v408, %v410
    %v418 = vsel %vm120, %v414, %v408
    %v419 = vmul.f32 %v418, %v128
    %v420 = vmul.f32 %v417, %v129
    %v421 = vmul.f32 %v416, %v130
    %v422 = vmul.f32 %v415, %v131
    %423 = vrot.lane.b32.xlu0 %v371, 1
    %v424 = vpop.permute.xlu0 %423
    %425 = vrot.lane.b32.xlu0 %v372, 1
    %v426 = vpop.permute.xlu0 %425
    %427 = vrot.lane.b32.xlu0 %v373, 1
    %v428 = vpop.permute.xlu0 %427
    %429 = vrot.lane.b32.xlu0 %v374, 1
    %v430 = vpop.permute.xlu0 %429
    %v431 = vsel %vm148, %v428, %v430
    %v432 = vsel %vm148, %v426, %v428
    %v433 = vsel %vm148, %v424, %v426
    %v434 = vsel %vm148, %v430, %v424
    %v435 = vmul.f32 %v434, %v156
    %v436 = vmul.f32 %v433, %v157
    %v437 = vmul.f32 %v432, %v158
    %v438 = vmul.f32 %v431, %v159
    %439 = vrot.lane.b32.xlu0 %v371, 127
    %v440 = vpop.permute.xlu0 %439
    %441 = vrot.lane.b32.xlu0 %v372, 127
    %v442 = vpop.permute.xlu0 %441
    %443 = vrot.lane.b32.xlu0 %v373, 127
    %v444 = vpop.permute.xlu0 %443
    %445 = vrot.lane.b32.xlu0 %v374, 127
    %v446 = vpop.permute.xlu0 %445
    %v447 = vsel %vm176, %v444, %v446
    %v448 = vsel %vm176, %v442, %v444
    %v449 = vsel %vm176, %v440, %v442
    %v450 = vsel %vm176, %v446, %v440
    %v451 = vmul.f32 %v449, %v184
    %v452 = vmul.f32 %v448, %v185
    %v453 = vmul.f32 %v447, %v186
    %v454 = vmul.f32 %v450, %v187
    %455 = vrot.lane.b32.xlu0 %v371, 113
    %v456 = vpop.permute.xlu0 %455
    %457 = vrot.lane.b32.xlu0 %v372, 113
    %v458 = vpop.permute.xlu0 %457
    %459 = vrot.lane.b32.xlu0 %v373, 113
    %v460 = vpop.permute.xlu0 %459
    %461 = vrot.lane.b32.xlu0 %v374, 113
    %v462 = vpop.permute.xlu0 %461
    %v463 = vsel %vm204, %v460, %v462
    %v464 = vsel %vm204, %v458, %v460
    %v465 = vsel %vm204, %v456, %v458
    %v466 = vsel %vm204, %v462, %v456
    %v467 = vmul.f32 %v465, %v212
    %v468 = vmul.f32 %v464, %v213
    %v469 = vmul.f32 %v463, %v214
    %v470 = vmul.f32 %v466, %v215
    %471 = vrot.lane.b32.xlu0 %v371, 112
    %v472 = vpop.permute.xlu0 %471
    %473 = vrot.lane.b32.xlu0 %v372, 112
    %v474 = vpop.permute.xlu0 %473
    %475 = vrot.lane.b32.xlu0 %v373, 112
    %v476 = vpop.permute.xlu0 %475
    %477 = vrot.lane.b32.xlu0 %v374, 112
    %v478 = vpop.permute.xlu0 %477
    %v479 = vsel %vm232, %v476, %v478
    %v480 = vsel %vm232, %v474, %v476
    %v481 = vsel %vm232, %v472, %v474
    %v482 = vsel %vm232, %v478, %v472
    %v483 = vmul.f32 %v481, %v240
    %v484 = vmul.f32 %v480, %v241
    %v485 = vmul.f32 %v479, %v242
    %v486 = vmul.f32 %v482, %v243
    %487 = vrot.lane.b32.xlu0 %v371, 111
    %v488 = vpop.permute.xlu0 %487
    %489 = vrot.lane.b32.xlu0 %v372, 111
    %v490 = vpop.permute.xlu0 %489
    %491 = vrot.lane.b32.xlu0 %v373, 111
    %v492 = vpop.permute.xlu0 %491
    %493 = vrot.lane.b32.xlu0 %v374, 111
    %v494 = vpop.permute.xlu0 %493
    %v495 = vsel %vm260, %v492, %v494
    %v496 = vsel %vm260, %v490, %v492
    %v497 = vsel %vm260, %v488, %v490
    %v498 = vsel %vm260, %v494, %v488
    %v499 = vmul.f32 %v497, %v268
    %v500 = vmul.f32 %v496, %v269
    %v501 = vmul.f32 %v495, %v270
    %v502 = vmul.f32 %v498, %v271
    %v503 = vld [vmem:[%s2] sm:$0xff]
    %s504 = scalar_lea.vmem %s4, 8
    %v505 = vld [vmem:[%s504] sm:$0xff]
    %507 = vset.pattern.permute.xlu0 0
    %508 = vperm.xlu0 %507, %v505
    %v509 = vpop.permute.xlu0 %508
    %v512 = vsel %vm287, %v503, 0
    %514 = vmatpush.msra.mxu0 0.0
    %515 = vmatpush.msra.mxu0 0.0
    %516 = vmatpush.msra.mxu0 0.0
    %517 = vmatpush.msra.mxu0 0.0
    %518 = vmatpush.msra.mxu0 0.0
    %519 = vmatpush.msra.mxu0 0.0
    %520 = vmatpush.msra.mxu0 0.0
    %521 = vmatpush.msra.mxu0 %v499
    %522 = vmatpush.msra.mxu0 %v483
    %523 = vmatpush.msra.mxu0 %v467
    %524 = vmatpush.msra.mxu0 %v451
    %525 = vmatpush.msra.mxu0 %v371
    %526 = vmatpush.msra.mxu0 %v435
    %527 = vmatpush.msra.mxu0 %v419
    %528 = vmatpush.msra.mxu0 %v403
    %529 = vmatpush.msra.mxu0 %v387
    %530 = vmatmul.f32.gmra.mxu0 %v512
    %v531 = vpop.f32.mrf.mxu0
    %v532 = vadd.f32 %v509, %v531
    %533 = vdwg.mxu0
    %534 = vmatpush.msra.mxu0 0.0
    %535 = vmatpush.msra.mxu0 0.0
    %536 = vmatpush.msra.mxu0 0.0
    %537 = vmatpush.msra.mxu0 0.0
    %538 = vmatpush.msra.mxu0 0.0
    %539 = vmatpush.msra.mxu0 0.0
    %540 = vmatpush.msra.mxu0 0.0
    %541 = vmatpush.msra.mxu0 %v500
    %542 = vmatpush.msra.mxu0 %v484
    %543 = vmatpush.msra.mxu0 %v468
    %544 = vmatpush.msra.mxu0 %v452
    %545 = vmatpush.msra.mxu0 %v372
    %546 = vmatpush.msra.mxu0 %v436
    %547 = vmatpush.msra.mxu0 %v420
    %548 = vmatpush.msra.mxu0 %v404
    %549 = vmatpush.msra.mxu0 %v388
    %550 = vmatmul.f32.gmra.mxu0 %v512
    %v551 = vpop.f32.mrf.mxu0
    %v552 = vadd.f32 %v509, %v551
    %553 = vdwg.mxu0
    %554 = vmatpush.msra.mxu0 0.0
    %555 = vmatpush.msra.mxu0 0.0
    %556 = vmatpush.msra.mxu0 0.0
    %557 = vmatpush.msra.mxu0 0.0
    %558 = vmatpush.msra.mxu0 0.0
    %559 = vmatpush.msra.mxu0 0.0
    %560 = vmatpush.msra.mxu0 0.0
    %561 = vmatpush.msra.mxu0 %v501
    %562 = vmatpush.msra.mxu0 %v485
    %563 = vmatpush.msra.mxu0 %v469
    %564 = vmatpush.msra.mxu0 %v453
    %565 = vmatpush.msra.mxu0 %v373
    %566 = vmatpush.msra.mxu0 %v437
    %567 = vmatpush.msra.mxu0 %v421
    %568 = vmatpush.msra.mxu0 %v405
    %569 = vmatpush.msra.mxu0 %v389
    %570 = vmatmul.f32.gmra.mxu0 %v512
    %v571 = vpop.f32.mrf.mxu0
    %v572 = vadd.f32 %v509, %v571
    %573 = vdwg.mxu0
    %574 = vmatpush.msra.mxu0 0.0
    %575 = vmatpush.msra.mxu0 0.0
    %576 = vmatpush.msra.mxu0 0.0
    %577 = vmatpush.msra.mxu0 0.0
    %578 = vmatpush.msra.mxu0 0.0
    %579 = vmatpush.msra.mxu0 0.0
    %580 = vmatpush.msra.mxu0 0.0
    %581 = vmatpush.msra.mxu0 %v502
    %582 = vmatpush.msra.mxu0 %v486
    %583 = vmatpush.msra.mxu0 %v470
    %584 = vmatpush.msra.mxu0 %v454
    %585 = vmatpush.msra.mxu0 %v374
    %586 = vmatpush.msra.mxu0 %v438
    %587 = vmatpush.msra.mxu0 %v422
    %588 = vmatpush.msra.mxu0 %v406
    %589 = vmatpush.msra.mxu0 %v390
    %590 = vmatmul.f32.gmra.mxu0 %v512
    %v591 = vpop.f32.mrf.mxu0
    %v592 = vadd.f32 %v509, %v591
    %593 = vdwg.mxu0
    %v594 = vadd.f32 %v532, %v51
    %v595 = vadd.f32 %v552, %v52
    %v596 = vadd.f32 %v572, %v53
    %v597 = vadd.f32 %v592, %v54
    %v598 = vmax.f32 %v594, 0.0
    %v599 = vmax.f32 %v595, 0.0
    %v600 = vmax.f32 %v596, 0.0
    %v601 = vmax.f32 %v597, 0.0
    %602 = vst [vmem:[#allocation7] sm:$0xff] %v598
    %603 = vst [vmem:[#allocation7 + $0x8] sm:$0xff] %v599
    %604 = vst [vmem:[#allocation7 + $0x10] sm:$0xff] %v600
    %605 = vst [vmem:[#allocation7 + $0x18] sm:$0xff] %v601
    // Predicated region
    $region30: #{tpu_custom_call.1} parent=1 // pred_check
      _
    $region31: #{tpu_custom_call.1} parent=1 // pred_check_branch
      %607 = sbr.rel (0) target = $region33
    $region32: #{tpu_custom_call.1} parent=1 // pred_region
      %609 = vsyncadd [#allocation4], 0
      %s611 = sshll.u32 [#allocation7], 4
      %s612 = int_to_ptr.vmem [resolvable:$true] %s611
      %s613 = sshll.u32 %s5, 4
      %s614 = int_to_ptr.hbm [resolvable:$true] %s613
      %616 = dma.vmem_to_hbm [thread:$0]  %s612, 512, %s614, [#allocation4]
    $region33: #{tpu_custom_call.1} parent=1 // pred_fallthru
      _
    // Predicated region
    $region34: #{tpu_custom_call.1} parent=1 // pred_check
      _
    $region35: #{tpu_custom_call.1} parent=1 // pred_check_branch
      %618 = sbr.rel (0) target = $region37
    $region36: #{tpu_custom_call.1} parent=1 // pred_region
      %620 = dma.done [#allocation4], 512
    $region37: #{tpu_custom_call.1} parent=1 // pred_fallthru
      _
    %621 = vsyncpa [#allocation3], 1
    %622 = vsyncpa [#allocation6], 1
    %623 = vsyncpa [#allocation4], 1

</llo_original>
